<compile_context>
chip_gen: v5e
topology: v5e:2x2
jax: 0.10.0
libtpu: 0.0.40
codegen_flags: <defaults>
</compile_context>

<pallas_src>
import math
import functools

import jax
import jax.numpy as jnp
from jax.experimental import pallas as pl
from jax.experimental.pallas import tpu as pltpu

_VMEM_LIMIT = 48 * 1024 * 1024   # < v7x 64 MiB physical, > all default scoped limits


# ----------------------------------------------------------------------------
# Channels-major projection kernel:  Y = W @ X + b
#   W: torch-layout (Dout, Din)   X: (Din, C) slab (one per (batch, time))
# Natural MXU orientation for both operands -> no weight transpose, no relayout.
# ----------------------------------------------------------------------------
def _proj_kernel(x_ref, w_ref, b_ref, o_ref):
    acc = jax.lax.dot_general(
        w_ref[...], x_ref[...],
        dimension_numbers=(((1,), (0,)), ((), ())),      # contract Din
        preferred_element_type=jnp.float32)               # (Dout, tc)
    o_ref[...] = (acc + b_ref[...]).astype(o_ref.dtype)   # bias broadcast over cols


def project_channels_major(x, w, b, *, block_cols=512):
    # x: (S, Din, C) with S = B*T; w: (Dout, Din); b: (Dout,)
    S, din, C = x.shape
    dout = w.shape[0]
    b2 = b.reshape(dout, 1)

    tc = C if C <= block_cols else (block_cols // 128) * 128   # lane-aligned col tile
    grid = (S, pl.cdiv(C, tc))

    # TODO(synk): tile Dout as well for very large d_model (weight residency).
    return pl.pallas_call(
        _proj_kernel,
        out_shape=jax.ShapeDtypeStruct((S, dout, C), x.dtype),
        grid=grid,
        in_specs=[
            pl.BlockSpec((None, din, tc), lambda s, j: (s, 0, j)),   # streamed slabs
            pl.BlockSpec((dout, din), lambda s, j: (0, 0)),          # W resident
            pl.BlockSpec((dout, 1), lambda s, j: (0, 0)),            # b resident
        ],
        out_specs=pl.BlockSpec((None, dout, tc), lambda s, j: (s, 0, j)),
        compiler_params=pltpu.CompilerParams(
            dimension_semantics=("parallel", "parallel"),
            vmem_limit_bytes=_VMEM_LIMIT),
    )(x, w, b2)


# ----------------------------------------------------------------------------
# Fused attention kernel.  Grid = (batch, M-tile); all heads fused per step.
# ----------------------------------------------------------------------------
def _attention_kernel(q_ref, k_ref, vrep_ref, o_ref, *, H, d_k, R):
    # q_ref   : (Mt, D)       query rows (t, r, nq), cols (h, d_k)
    # k_ref   : (R, T*Nk, D)  keys grouped per key-resolution r'; rows (t', nk)
    # vrep_ref: (T*Nk, D)     vmean tiled over t', with 1/(T*R) already folded in
    # o_ref   : (Mt, D)       lane-dense output block
    D = H * d_k
    scale = 1.0 / math.sqrt(d_k)

    q = q_ref[...] * scale                                # fold 1/sqrt(d_k) once
    vr = vrep_ref[...]                                    # (TNk, D)
    Mt = q.shape[0]
    TNk = vr.shape[0]

    # head id of each channel lane (2-D iota as required on TPU)
    head_of_lane = jax.lax.broadcasted_iota(jnp.int32, (1, D), 1) // d_k

    acc = jnp.zeros((Mt, D), dtype=jnp.float32)           # dense accumulator
    for hd in range(H):                                   # static, H is small
        hm = head_of_lane == hd
        q_h = jnp.where(hm, q, 0.0)                       # zero other heads' lanes
        v_h = jnp.where(hm, vr, 0.0)                      # -> head output columns

        def r_body(r, p_sum):
            # scores for key-resolution r': contraction over full D (zeros kill
            # cross-head terms) -> good MXU fill for small d_k, no lane slicing.
            s = jax.lax.dot_general(
                q_h, k_ref[r],
                dimension_numbers=(((1,), (1,)), ((), ())),
                preferred_element_type=jnp.float32)        # (Mt, TNk)
            # softmax jointly over (t', nk) -- matches torch reshape-softmax
            m = jnp.max(s, axis=-1, keepdims=True)
            e = jnp.exp(s - m)
            inv = pl.reciprocal(jnp.sum(e, axis=-1, keepdims=True), approx=False)
            return p_sum + e * inv                         # accumulate over r'

        p_sum = jax.lax.fori_loop(
            0, R, r_body, jnp.zeros((Mt, TNk), jnp.float32))

        # single PV matmul per head (hoisted out of the r loop): the matmul also
        # performs the sum over t' because vrep tiles vmean over t'.
        acc = acc + jax.lax.dot_general(
            p_sum, v_h,
            dimension_numbers=(((1,), (0,)), ((), ())),
            preferred_element_type=jnp.float32)            # (Mt, D)

    o_ref[...] = acc.astype(o_ref.dtype)                   # single lane-dense store


def attention_fused(q_att, k_grp, v_rep, *, H, d_k, R, block_m=512):
    # q_att: (B, M, D); k_grp: (B, R, T*Nk, D); v_rep: (B, T*Nk, D)
    B, M, D = q_att.shape
    TNk = v_rep.shape[1]

    mt = min(block_m, M)
    if mt < M:
        mt = max(8, (mt // 8) * 8)      # (8,128) rule on the second-minor block dim
    grid = (B, pl.cdiv(M, mt))

    kernel = functools.partial(_attention_kernel, H=H, d_k=d_k, R=R)
    return pl.pallas_call(
        kernel,
        out_shape=jax.ShapeDtypeStruct((B, M, D), q_att.dtype),
        grid=grid,
        in_specs=[
            pl.BlockSpec((None, mt, D), lambda b, i: (b, i, 0)),        # streamed q tiles
            pl.BlockSpec((None, R, TNk, D), lambda b, i: (b, 0, 0, 0)),  # K resident per b
            pl.BlockSpec((None, TNk, D), lambda b, i: (b, 0, 0)),        # vmean tile
        ],
        out_specs=pl.BlockSpec((None, mt, D), lambda b, i: (b, i, 0)),
        compiler_params=pltpu.CompilerParams(
            dimension_semantics=("parallel", "parallel"),   # shards over 2 TCs on v7x
            vmem_limit_bytes=_VMEM_LIMIT),
    )(q_att, k_grp, v_rep)


# ----------------------------------------------------------------------------
# Full MultiHeadedAttention.forward (mask=None path)
# ----------------------------------------------------------------------------
def multi_headed_attention_forward(q, k, v, params, h, modes_in):
    B, T, D, R, Nq = q.shape
    Nk = k.shape[4]
    d_k = D // h
    M = T * R * Nq

    # Projections on the ORIGINAL channels-major layout: no input permute, and
    # query_out / key_out fall out as pure reshapes of the projection result.
    q_cm = project_channels_major(q.reshape(B * T, D, R * Nq),
                                  params["wq"], params["bq"]).reshape(B, T, D, R, Nq)
    k_cm = project_channels_major(k.reshape(B * T, D, R * Nk),
                                  params["wk"], params["bk"]).reshape(B, T, D, R, Nk)
    v_cm = project_channels_major(v.reshape(B * T, D, R * Nk),
                                  params["wv"], params["bv"]).reshape(B, T, D, R, Nk)

    query_out = q_cm          # (B, T, D, R, Nq) -- already the module's output layout
    key_out = k_cm            # (B, T, D, R, Nk)

    # attention operands (channels-last): one relayout each for Q and K
    q_att = jnp.transpose(q_cm, (0, 1, 3, 4, 2)).reshape(B, M, D)
    k_grp = jnp.transpose(k_cm, (0, 3, 1, 4, 2)).reshape(B, R, T * Nk, D)

    # value mean over (t'', r''), with the (t', r') probability mean 1/(T*R)
    # folded in, tiled over t' so the PV matmul also performs the sum over t'.
    vmean = jnp.transpose(jnp.mean(v_cm, axis=(1, 3)), (0, 2, 1))      # (B, Nk, D)
    vmean = vmean * (1.0 / (T * R))
    v_rep = jnp.broadcast_to(vmean[:, None, :, :],
                             (B, T, Nk, D)).reshape(B, T * Nk, D)

    x = attention_fused(q_att, k_grp, v_rep, H=h, d_k=d_k, R=R)         # (B, M, D)

    x5 = x.reshape(B, T, R, Nq, D)
    # slice Nq down to modes_in before transposing (less data moved)
    x_out = jnp.transpose(x5[:, :, :, :modes_in, :], (0, 1, 4, 2, 3))   # (B,T,D,R,modes_in)
    return query_out, key_out, x_out


# ----------------------------------------------------------------------------
# Pure-JAX reference that mirrors the PyTorch code line by line
# ----------------------------------------------------------------------------
def reference_forward(q, k, v, params, h, modes_in):
    hp = jax.lax.Precision.HIGHEST
    query = jnp.transpose(q, (0, 1, 3, 4, 2))
    key_ = jnp.transpose(k, (0, 1, 3, 4, 2))
    value = jnp.transpose(v, (0, 1, 3, 4, 2))
    B, T, R, Nq, D = query.shape
    Nk = key_.shape[3]
    d_k = D // h
    Q = jnp.matmul(query, params["wq"].T, precision=hp) + params["bq"]
    K = jnp.matmul(key_, params["wk"].T, precision=hp) + params["bk"]
    V = jnp.matmul(value, params["wv"].T, precision=hp) + params["bv"]
    Qh = Q.reshape(B, T, R, Nq, h, d_k)
    Kh = K.reshape(B, T, R, Nk, h, d_k)
    Vh = V.reshape(B, T, R, Nk, h, d_k)
    qp8 = jnp.transpose(Qh, (0, 4, 1, 2, 3, 5))[:, :, :, :, None, None, :, :]
    kp8 = jnp.transpose(Kh, (0, 4, 1, 2, 3, 5))[:, :, None, None, :, :, :, :]
    vp8 = jnp.transpose(Vh, (0, 4, 1, 2, 3, 5))[:, :, None, None, :, :, :, :]
    scores = jnp.matmul(qp8, jnp.swapaxes(kp8, -1, -2), precision=hp) / math.sqrt(d_k)
    s1 = jnp.transpose(scores, (0, 1, 3, 5, 2, 6, 4, 7))
    s2 = s1.reshape(B, h, R, R, T * Nq, T * Nk)
    p = jax.nn.softmax(s2, axis=-1).reshape(B, h, R, R, T, Nq, T, Nk)
    p_ = jnp.transpose(p, (0, 1, 4, 2, 6, 3, 5, 7))
    pm = jnp.mean(jnp.mean(p_, axis=4, keepdims=True), axis=5, keepdims=True)
    res = jnp.matmul(pm, vp8, precision=hp)
    res = jnp.mean(jnp.mean(res, axis=4), axis=4)
    res = jnp.transpose(res, (0, 2, 3, 4, 1, 5))
    x = res.reshape(B, T, R, Nq, D)
    query_out = jnp.transpose(Q, (0, 1, 4, 2, 3))
    key_out = jnp.transpose(K, (0, 1, 4, 2, 3))
    x_out = jnp.transpose(x, (0, 1, 4, 2, 3))[..., :modes_in]
    return query_out, key_out, x_out


if __name__ == "__main__":
    # Small but axis-distinct shapes: B=2, T=2, d_model=32 (h=4, d_k=8),
    # res=8, q_nfunctions=6, kv_nfunctions=4, modes_in=3.
    B, T, D, R = 2, 2, 32, 8
    Nq, Nk = 6, 4
    h, modes_in = 4, 3

    key = jax.random.PRNGKey(0)
    ks = jax.random.split(key, 9)
    bound = 1.0 / math.sqrt(D)
    params = {
        "wq": jax.random.uniform(ks[0], (D, D), jnp.float32, -bound, bound),
        "bq": jax.random.uniform(ks[1], (D,), jnp.float32, -bound, bound),
        "wk": jax.random.uniform(ks[2], (D, D), jnp.float32, -bound, bound),
        "bk": jax.random.uniform(ks[3], (D,), jnp.float32, -bound, bound),
        "wv": jax.random.uniform(ks[4], (D, D), jnp.float32, -bound, bound),
        "bv": jax.random.uniform(ks[5], (D,), jnp.float32, -bound, bound),
    }
    q = jax.random.normal(ks[6], (B, T, D, R, Nq), jnp.float32)
    k = jax.random.normal(ks[7], (B, T, D, R, Nk), jnp.float32)
    v = jax.random.normal(ks[8], (B, T, D, R, Nk), jnp.float32)

    qo, ko, xo = jax.block_until_ready(
        multi_headed_attention_forward(q, k, v, params, h, modes_in))

    rq, rk, rx = reference_forward(q, k, v, params, h, modes_in)

    assert qo.shape == (B, T, D, R, Nq)
    assert ko.shape == (B, T, D, R, Nk)
    assert xo.shape == (B, T, D, R, modes_in)
    # Tolerance covers possible MXU multi-pass f32 matmul differences vs the
    # HIGHEST-precision XLA reference.
    for got, want in ((qo, rq), (ko, rk), (xo, rx)):
        err = float(jnp.max(jnp.abs(got - want)))
        assert jnp.allclose(got, want, atol=1e-2, rtol=1e-2), err

    print("KERNEL_OK")
</pallas_src>

<mosaic_0001>
module attributes {stable_mosaic.version = 11 : i64} {
  func.func @_proj_kernel(%arg0: i32, %arg1: i32, %arg2: memref<1x32x48xf32, #tpu.memory_space<vmem>>, %arg3: memref<32x32xf32, #tpu.memory_space<vmem>>, %arg4: memref<32x1xf32, #tpu.memory_space<vmem>>, %arg5: memref<1x32x48xf32, #tpu.memory_space<vmem>>) attributes {dimension_semantics = [#tpu.dimension_semantics<parallel>, #tpu.dimension_semantics<parallel>], iteration_bounds = array<i64: 4, 1>, scalar_prefetch = 0 : i64, scratch_operands = 0 : i64, tpu.core_type = #tpu.core_type<tc>, window_params = [{transform_indices = @transform_0, window_bounds = array<i64: 1, 32, 48>}, {pipeline_mode = #tpu.pipeline_mode<synchronous>, transform_indices = @transform_1, window_bounds = array<i64: 32, 32>}, {pipeline_mode = #tpu.pipeline_mode<synchronous>, transform_indices = @transform_2, window_bounds = array<i64: 32, 1>}, {transform_indices = @transform_3, window_bounds = array<i64: 1, 32, 48>}]} {
    %c0 = arith.constant 0 : index
    %c0_0 = arith.constant 0 : index
    %0 = vector.load %arg3[%c0, %c0_0] : memref<32x32xf32, #tpu.memory_space<vmem>>, vector<32x32xf32>
    %c0_1 = arith.constant 0 : index
    %c0_2 = arith.constant 0 : index
    %c0_3 = arith.constant 0 : index
    %1 = vector.load %arg2[%c0_1, %c0_2, %c0_3] : memref<1x32x48xf32, #tpu.memory_space<vmem>>, vector<1x32x48xf32>
    %2 = vector.shape_cast %1 : vector<1x32x48xf32> to vector<32x48xf32>
    %cst = arith.constant dense<0.000000e+00> : vector<32x48xf32>
    %3 = tpu.matmul %0, %2, %cst {dimension_numbers = #tpu.dot_dimension_numbers<[1], [0], [0], [1], [0, 0, 1, 1], [], []>} : vector<32x32xf32>, vector<32x48xf32>, vector<32x48xf32> -> vector<32x48xf32>
    %c0_4 = arith.constant 0 : index
    %c0_5 = arith.constant 0 : index
    %4 = vector.load %arg4[%c0_4, %c0_5] : memref<32x1xf32, #tpu.memory_space<vmem>>, vector<32x1xf32>
    %5 = vector.broadcast %4 : vector<32x1xf32> to vector<32x48xf32>
    %6 = arith.addf %3, %5 : vector<32x48xf32>
    %c0_6 = arith.constant 0 : index
    %c0_7 = arith.constant 0 : index
    %c0_8 = arith.constant 0 : index
    %7 = vector.load %arg5[%c0_6, %c0_7, %c0_8] : memref<1x32x48xf32, #tpu.memory_space<vmem>>, vector<1x32x48xf32>
    %8 = vector.shape_cast %7 : vector<1x32x48xf32> to vector<32x48xf32>
    %9 = vector.shape_cast %6 : vector<32x48xf32> to vector<1x32x48xf32>
    tpu.vector_store %arg5[%c0_6, %c0_7, %c0_8], %9 {strides = array<i32>} : memref<1x32x48xf32, #tpu.memory_space<vmem>>, vector<1x32x48xf32>,
    return
  }
  func.func @transform_0(%arg0: i32, %arg1: i32) -> (i32, i32, i32) {
    %c0_i32 = arith.constant 0 : i32
    %c0_i32_0 = arith.constant 0 : i32
    return %arg0, %c0_i32, %arg1 : i32, i32, i32
  }
  func.func @transform_1(%arg0: i32, %arg1: i32) -> (i32, i32) {
    %c0_i32 = arith.constant 0 : i32
    %c0_i32_0 = arith.constant 0 : i32
    %c0_i32_1 = arith.constant 0 : i32
    return %c0_i32, %c0_i32_0 : i32, i32
  }
  func.func @transform_2(%arg0: i32, %arg1: i32) -> (i32, i32) {
    %c0_i32 = arith.constant 0 : i32
    %c0_i32_0 = arith.constant 0 : i32
    %c0_i32_1 = arith.constant 0 : i32
    return %c0_i32, %c0_i32_0 : i32, i32
  }
  func.func @transform_3(%arg0: i32, %arg1: i32) -> (i32, i32, i32) {
    %c0_i32 = arith.constant 0 : i32
    %c0_i32_0 = arith.constant 0 : i32
    return %arg0, %c0_i32, %arg1 : i32, i32, i32
  }
}

</mosaic_0001>

<llo_original>
// kernel: tpu_custom_call.1
$region0: #{tpu_custom_call.1}
  #allocation0 [shape = 'u32[]', space=smem, size = 0x4, offset = 0x4, fixed_abs, tag = 'smem constant byte address 0x4 - core index']
  #allocation1 [shape = 'u32[72,128]{1,0:T(1,128)}', space=vmem, size = 0x9000, scoped, tag = 'internal scratch']
  %s0 = inlined_call_operand.hbm [shape: f32[4,32,48], index: 0, kind: input, shape index: {}]
  %s1 = inlined_call_operand.vmem [shape: f32[32,32], index: 1, kind: input, shape index: {}]
  %s2 = inlined_call_operand.vmem [shape: f32[32,1], index: 2, kind: input, shape index: {}]
  %s3 = inlined_call_operand.hbm [shape: f32[4,32,48], index: 3, kind: output, shape index: {}]
  %s4 = sld [smem:[#allocation0]]
  $region49: #{tpu_custom_call.1} parent=0
    _
  %s6 = ssub.s32 1, %s4
  %s7 = scalar_select 0, %s6, %s4
  $region1: #{tpu_custom_call.1} parent=0
    #allocation2 [shape = 'u8[32768]{0}', space=vmem, size = 0x8000, scoped, tag = 'input window, operand 0']
    #allocation3 [shape = 's32[2]{0}', space=sflag, size = 0x8, scoped, tag = 'scoped memory for tpu_custom_call.1']
    #allocation4 [shape = 's32[2]{0}', space=sflag, size = 0x8, scoped, tag = 'scoped memory for tpu_custom_call.1']
    #allocation5 [shape = 'u8[32768]{0}', space=vmem, size = 0x8000, scoped, tag = 'output window, operand 0']
    %8 = vsyncpa [#allocation3], 0
    %s9 = scalar_lea.sflag [#allocation3], 1
    %10 = vsyncpa %s9, 0
    %11 = vsyncpa [#allocation4], 0
    %s12 = scalar_lea.sflag [#allocation4], 1
    %13 = vsyncpa %s12, 0
    loop: start=0, step=1, limit=6
    $region2: #{tpu_custom_call.1} parent=1 // loop_pre_header
      _
    $region3: #{tpu_custom_call.1} parent=1 // loop_header
      %s15 = sphi 0, %s19
      %p16 = scmp.ge.s32.totalorder %s15, 6
      %s22 = sphi 0, %s34
      %s23 = sphi 0, %s30
      %s24 = sphi 0, %s22
      %s25 = sphi 0, %s23
      %s26 = sphi 0, %s24
      %s27 = sphi 0, %s25
      %s39 = sphi 0, %s41
      %s42 = sphi 0, %s39
      %s43 = sphi 0, %s42
      %s59 = sphi 0, %s43
      %s63 = sphi 0, %s63
      %s65 = sphi 0, %s63
      %s66 = sphi 0, %s65
      %s80 = sphi 0, %s66
      %s84 = sphi 0, %s84
      %s86 = sphi 0, %s84
      %s87 = sphi 0, %s86
      %s101 = sphi 0, %s87
      %s109 = sphi 0, %s111
      %s112 = sphi 0, %s109
      %s113 = sphi 0, %s112
      %s129 = sphi 0, %s113
    $region4: #{tpu_custom_call.1} parent=1 // loop_header_branch
      %18 = sbr.rel (%p16) target = $region8
    $region5: #{tpu_custom_call.1} parent=1 // loop_body
      %s20 = ssub.s32 %s15, 1
      %s21 = ssub.s32 %s15, 2
      %s28 = sadd.s32 1, %s23
      %p29 = scmp.ge.s32.totalorder %s28, 1
      %s30 = scalar_select %p29, 0, %s28
      %s31 = sadd.s32 1, %s22
      %s32 = scalar_select %p29, %s31, %s22
      %p33 = scmp.ge.s32.totalorder %s32, 4
      %s34 = scalar_select %p33, 0, %s32
      %s35 = ssub.s32 %s22, %s34
      %s36 = ssub.s32 %s23, %s30
      %s37 = sor.u32 %s35, %s36
      %p38 = scmp.eq.s32.totalorder %s37, 0
      %s40 = sadd.s32 %s39, 1
      %s41 = scalar_select %p38, %s39, %s40
      %p44 = pneg %p38
      %p45 = scmp.eq.s32.totalorder %s15, 3
      %p46 = por %p44, %p45
      %p47 = scmp.ne.s32.totalorder %s39, %s42
      %p48 = scmp.eq.s32.totalorder %s15, 0
      %p49 = por %p47, %p48
      %p50 = scmp.ne.s32.totalorder %s39, %s42
      %p51 = scmp.eq.s32.totalorder %s20, 3
      %p52 = por %p50, %p51
      %p53 = scmp.ne.s32.totalorder %s42, %s43
      %p54 = scmp.eq.s32.totalorder %s20, 0
      %p55 = por %p53, %p54
      %p56 = scmp.ne.s32.totalorder %s42, %s43
      %p57 = scmp.eq.s32.totalorder %s21, 3
      %p58 = por %p56, %p57
      %p60 = scmp.ne.s32.totalorder %s43, %s59
      %p61 = scmp.eq.s32.totalorder %s21, 0
      %p62 = por %p60, %p61
      %s64 = sadd.s32 %s63, 1
      %p67 = scmp.eq.s32.totalorder %s15, 3
      %p68 = scmp.ne.s32.totalorder %s63, %s65
      %p69 = scmp.eq.s32.totalorder %s15, 0
      %p70 = por %p68, %p69
      %p71 = scmp.ne.s32.totalorder %s63, %s65
      %p72 = scmp.eq.s32.totalorder %s20, 3
      %p73 = por %p71, %p72
      %p74 = scmp.ne.s32.totalorder %s65, %s66
      %p75 = scmp.eq.s32.totalorder %s20, 0
      %p76 = por %p74, %p75
      %p77 = scmp.ne.s32.totalorder %s65, %s66
      %p78 = scmp.eq.s32.totalorder %s21, 3
      %p79 = por %p77, %p78
      %p81 = scmp.ne.s32.totalorder %s66, %s80
      %p82 = scmp.eq.s32.totalorder %s21, 0
      %p83 = por %p81, %p82
      %s85 = sadd.s32 %s84, 1
      %p88 = scmp.eq.s32.totalorder %s15, 3
      %p89 = scmp.ne.s32.totalorder %s84, %s86
      %p90 = scmp.eq.s32.totalorder %s15, 0
      %p91 = por %p89, %p90
      %p92 = scmp.ne.s32.totalorder %s84, %s86
      %p93 = scmp.eq.s32.totalorder %s20, 3
      %p94 = por %p92, %p93
      %p95 = scmp.ne.s32.totalorder %s86, %s87
      %p96 = scmp.eq.s32.totalorder %s20, 0
      %p97 = por %p95, %p96
      %p98 = scmp.ne.s32.totalorder %s86, %s87
      %p99 = scmp.eq.s32.totalorder %s21, 3
      %p100 = por %p98, %p99
      %p102 = scmp.ne.s32.totalorder %s87, %s101
      %p103 = scmp.eq.s32.totalorder %s21, 0
      %p104 = por %p102, %p103
      %s105 = ssub.s32 %s22, %s34
      %s106 = ssub.s32 %s23, %s30
      %s107 = sor.u32 %s105, %s106
      %p108 = scmp.eq.s32.totalorder %s107, 0
      %s110 = sadd.s32 %s109, 1
      %s111 = scalar_select %p108, %s109, %s110
      %p114 = pneg %p108
      %p115 = scmp.eq.s32.totalorder %s15, 3
      %p116 = por %p114, %p115
      %p117 = scmp.ne.s32.totalorder %s109, %s112
      %p118 = scmp.eq.s32.totalorder %s15, 0
      %p119 = por %p117, %p118
      %p120 = scmp.ne.s32.totalorder %s109, %s112
      %p121 = scmp.eq.s32.totalorder %s20, 3
      %p122 = por %p120, %p121
      %p123 = scmp.ne.s32.totalorder %s112, %s113
      %p124 = scmp.eq.s32.totalorder %s20, 0
      %p125 = por %p123, %p124
      %p126 = scmp.ne.s32.totalorder %s112, %s113
      %p127 = scmp.eq.s32.totalorder %s21, 3
      %p128 = por %p126, %p127
      %p130 = scmp.ne.s32.totalorder %s113, %s129
      %p131 = scmp.eq.s32.totalorder %s21, 0
      %p132 = por %p130, %p131
      %p133 = scmp.le.s32.totalorder 1, %s15
      %p134 = scmp.lt.s32.totalorder %s15, 5
      %p135 = pnand %p133, %p134
      %p136 = pneg %p135
      // Predicated region
      $region9: #{tpu_custom_call.1} parent=5 // pred_check
        _
      $region10: #{tpu_custom_call.1} parent=5 // pred_check_branch
        %138 = sbr.rel (%p135) target = $region12
      $region11: #{tpu_custom_call.1} parent=5 // pred_region
        %s139 = ssub.s32 %s15, 1
        // Predicated region
        $region13: #{tpu_custom_call.1} parent=11 // pred_check
          %p140 = pneg %p76
        $region14: #{tpu_custom_call.1} parent=11 // pred_check_branch
          %142 = sbr.rel (%p140) target = $region16
        $region15: #{tpu_custom_call.1} parent=11 // pred_region
          _
        $region16: #{tpu_custom_call.1} parent=11 // pred_fallthru
          _
        // Predicated region
        $region17: #{tpu_custom_call.1} parent=11 // pred_check
          %p143 = pneg %p97
        $region18: #{tpu_custom_call.1} parent=11 // pred_check_branch
          %145 = sbr.rel (%p143) target = $region20
        $region19: #{tpu_custom_call.1} parent=11 // pred_region
          _
        $region20: #{tpu_custom_call.1} parent=11 // pred_fallthru
          _
      $region12: #{tpu_custom_call.1} parent=5 // pred_fallthru
        _
      %p146 = scmp.lt.s32.totalorder %s15, 4
      // Predicated region
      $region21: #{tpu_custom_call.1} parent=5 // pred_check
        %p147 = pneg %p146
      $region22: #{tpu_custom_call.1} parent=5 // pred_check_branch
        %149 = sbr.rel (%p147) target = $region24
      $region23: #{tpu_custom_call.1} parent=5 // pred_region
        // Predicated region
        $region25: #{tpu_custom_call.1} parent=23 // pred_check
          %p150 = pneg %p49
        $region26: #{tpu_custom_call.1} parent=23 // pred_check_branch
          %152 = sbr.rel (%p150) target = $region28
        $region27: #{tpu_custom_call.1} parent=23 // pred_region
          %s153 = sand.u32 %s39, 1
          %s154 = scalar_lea.sflag [#allocation3], %s153
          %s155 = sand.u32 %s39, 1
          %s156 = smul.addr %s155, 32
          %s157 = scalar_lea.vmem [#allocation2], %s156
          %159 = vsyncadd %s154, 0
          %s160 = smul.addr %s22, 4
          %s161 = sadd.s32 %s23, %s160
          %s162 = smul.addr %s161, 8
          %s163 = scalar_lea.hbm %s0, %s162
          %s164 = sshll.u32 %s163, 4
          %s165 = int_to_ptr.hbm [resolvable:$true] %s164
          %s166 = sshll.u32 %s157, 4
          %s167 = int_to_ptr.vmem [resolvable:$true] %s166
          %172 = dma.hbm_to_vmem [thread:$0]  %s165, 512, %s167, %s154, 128, 128, 8
        $region28: #{tpu_custom_call.1} parent=23 // pred_fallthru
          _
      $region24: #{tpu_custom_call.1} parent=5 // pred_fallthru
        _
      %p173 = scmp.le.s32.totalorder 1, %s15
      %p174 = scmp.lt.s32.totalorder %s15, 5
      %p175 = pnand %p173, %p174
      %p176 = pneg %p175
      // Predicated region
      $region29: #{tpu_custom_call.1} parent=5 // pred_check
        _
      $region30: #{tpu_custom_call.1} parent=5 // pred_check_branch
        %178 = sbr.rel (%p175) target = $region32
      $region31: #{tpu_custom_call.1} parent=5 // pred_region
        %s179 = ssub.s32 %s15, 1
        %s180 = sand.u32 %s42, 1
        %s181 = scalar_lea.sflag [#allocation3], %s180
        %s182 = sand.u32 %s42, 1
        %s183 = smul.addr %s182, 32
        %s184 = scalar_lea.vmem [#allocation2], %s183
        // Predicated region
        $region33: #{tpu_custom_call.1} parent=31 // pred_check
          %p185 = pneg %p55
        $region34: #{tpu_custom_call.1} parent=31 // pred_check_branch
          %187 = sbr.rel (%p185) target = $region36
        $region35: #{tpu_custom_call.1} parent=31 // pred_region
          %189 = dma.done %s181, 512
        $region36: #{tpu_custom_call.1} parent=31 // pred_fallthru
          _
        %s190 = sand.u32 %s42, 1
        %s191 = scalar_lea.sflag [#allocation3], %s190
        %s192 = sand.u32 %s42, 1
        %s193 = smul.addr %s192, 32
        %s194 = scalar_lea.vmem [#allocation2], %s193
        %p195 = pneg %p55
        %p196 = pneg %p52
        %p197 = pneg %p76
        %p198 = pneg %p73
        %p199 = pneg %p97
        %p200 = pneg %p94
        %p201 = pneg %p125
        %p202 = pneg %p122
        %s203 = sand.u32 %s112, 1
        %s204 = scalar_lea.sflag [#allocation4], %s203
        %s205 = sand.u32 %s112, 1
        %s206 = smul.addr %s205, 32
        %s207 = scalar_lea.vmem [#allocation5], %s206
        %v208 = vld [vmem:[%s1] sm:$0xff]
        %v209 = vld [vmem:[%s1 + $0x8] sm:$0xff]
        %v210 = vld [vmem:[%s1 + $0x10] sm:$0xff]
        %v211 = vld [vmem:[%s1 + $0x18] sm:$0xff]
        %v212 = vld [vmem:[%s184] sm:$0xff]
        %v213 = vld [vmem:[%s184 + $0x8] sm:$0xff]
        %v214 = vld [vmem:[%s184 + $0x10] sm:$0xff]
        %v215 = vld [vmem:[%s184 + $0x18] sm:$0xff]
        %v216 = vld [vmem:[%s2] sm:$0xff]
        %v217 = vld [vmem:[%s2 + $0x8] sm:$0xff]
        %v218 = vld [vmem:[%s2 + $0x10] sm:$0xff]
        %v219 = vld [vmem:[%s2 + $0x18] sm:$0xff]
        %221 = vset.pattern.permute.xlu0 0
        %222 = vperm.xlu0 %221, %v216
        %v223 = vpop.permute.xlu0 %222
        %226 = vset.pattern.permute.xlu0 0
        %227 = vperm.xlu0 %226, %v217
        %v228 = vpop.permute.xlu0 %227
        %231 = vset.pattern.permute.xlu0 0
        %232 = vperm.xlu0 %231, %v218
        %v233 = vpop.permute.xlu0 %232
        %236 = vset.pattern.permute.xlu0 0
        %237 = vperm.xlu0 %236, %v219
        %v238 = vpop.permute.xlu0 %237
        %vm240 = vcmask 261120
        %v242 = vsel %vm240, %v208, 0
        %v245 = vsel %vm240, %v209, 0
        %v248 = vsel %vm240, %v210, 0
        %v251 = vsel %vm240, %v211, 0
        %253 = vmatpush.msra.mxu0 0.0
        %254 = vmatpush.msra.mxu0 0.0
        %255 = vmatpush.msra.mxu0 0.0
        %256 = vmatpush.msra.mxu0 0.0
        %257 = vmatpush.msra.mxu0 0.0
        %258 = vmatpush.msra.mxu0 0.0
        %259 = vmatpush.msra.mxu0 0.0
        %260 = vmatpush.msra.mxu0 0.0
        %261 = vmatpush.msra.mxu0 0.0
        %262 = vmatpush.msra.mxu0 0.0
        %263 = vmatpush.msra.mxu0 0.0
        %264 = vmatpush.msra.mxu0 0.0
        %265 = vmatpush.msra.mxu0 %v215
        %266 = vmatpush.msra.mxu0 %v214
        %267 = vmatpush.msra.mxu0 %v213
        %268 = vmatpush.msra.mxu0 %v212
        %269 = vmatmul.f32.gmra.mxu0 %v242
        %v270 = vpop.f32.mrf.mxu0
        %v271 = vadd.f32 %v223, %v270
        %272 = vmatmul.f32.gmra.mxu0 %v245
        %v273 = vpop.f32.mrf.mxu0
        %v274 = vadd.f32 %v228, %v273
        %275 = vmatmul.f32.gmra.mxu0 %v248
        %v276 = vpop.f32.mrf.mxu0
        %v277 = vadd.f32 %v233, %v276
        %278 = vmatmul.f32.gmra.mxu0 %v251
        %v279 = vpop.f32.mrf.mxu0
        %v280 = vadd.f32 %v238, %v279
        %281 = vdwg.mxu0
        %vm282 = vcmask 392192
        %283 = vst.msk [vmem:[%s207] sm:$0xff] %vm282, %v271
        %284 = vst.msk [vmem:[%s207 + $0x8] sm:$0xff] %vm282, %v274
        %285 = vst.msk [vmem:[%s207 + $0x10] sm:$0xff] %vm282, %v277
        %286 = vst.msk [vmem:[%s207 + $0x18] sm:$0xff] %vm282, %v280
        %s287 = sand.u32 %s112, 1
        %s288 = scalar_lea.sflag [#allocation4], %s287
        %s289 = sand.u32 %s112, 1
        %s290 = smul.addr %s289, 32
        %s291 = scalar_lea.vmem [#allocation5], %s290
        // Predicated region
        $region37: #{tpu_custom_call.1} parent=31 // pred_check
          %p292 = pneg %p122
        $region38: #{tpu_custom_call.1} parent=31 // pred_check_branch
          %294 = sbr.rel (%p292) target = $region40
        $region39: #{tpu_custom_call.1} parent=31 // pred_region
          %296 = vsyncadd %s288, 0
          %s297 = smul.addr %s24, 4
          %s298 = sadd.s32 %s25, %s297
          %s299 = smul.addr %s298, 8
          %s300 = scalar_lea.hbm %s3, %s299
          %s301 = sshll.u32 %s291, 4
          %s302 = int_to_ptr.vmem [resolvable:$true] %s301
          %s303 = sshll.u32 %s300, 4
          %s304 = int_to_ptr.hbm [resolvable:$true] %s303
          %309 = dma.vmem_to_hbm [thread:$0]  %s302, 512, %s304, %s288, 128, 128, 8
        $region40: #{tpu_custom_call.1} parent=31 // pred_fallthru
          _
      $region32: #{tpu_custom_call.1} parent=5 // pred_fallthru
        _
      %p310 = scmp.le.s32.totalorder 2, %s15
      // Predicated region
      $region41: #{tpu_custom_call.1} parent=5 // pred_check
        %p311 = pneg %p310
      $region42: #{tpu_custom_call.1} parent=5 // pred_check_branch
        %313 = sbr.rel (%p311) target = $region44
      $region43: #{tpu_custom_call.1} parent=5 // pred_region
        %s314 = ssub.s32 %s15, 2
        // Predicated region
        $region45: #{tpu_custom_call.1} parent=43 // pred_check
          %p315 = pneg %p128
        $region46: #{tpu_custom_call.1} parent=43 // pred_check_branch
          %317 = sbr.rel (%p315) target = $region48
        $region47: #{tpu_custom_call.1} parent=43 // pred_region
          %s318 = sand.u32 %s113, 1
          %s319 = scalar_lea.sflag [#allocation4], %s318
          %s320 = sand.u32 %s113, 1
          %s321 = smul.addr %s320, 32
          %s322 = scalar_lea.vmem [#allocation5], %s321
          %324 = dma.done %s319, 512
        $region48: #{tpu_custom_call.1} parent=43 // pred_fallthru
          _
      $region44: #{tpu_custom_call.1} parent=5 // pred_fallthru
        _
    $region6: #{tpu_custom_call.1} parent=1 // loop_footer
      %s19 = sadd.s32 1, %s15
    $region7: #{tpu_custom_call.1} parent=1 // loop_footer_branch
      %14 = sbr.rel target = $region3
    $region8: #{tpu_custom_call.1} parent=1 // loop_exit
      _
    %325 = vsyncpa [#allocation3], 1
    %s326 = scalar_lea.sflag [#allocation3], 1
    %327 = vsyncpa %s326, 1
    %328 = vsyncpa [#allocation4], 1
    %s329 = scalar_lea.sflag [#allocation4], 1
    %330 = vsyncpa %s329, 1

</llo_original>
